<compile_context>
chip_gen: v7x
topology: tpu7x:2x2x1
jax: 0.10.0
libtpu: 0.0.40
codegen_flags: <defaults>
</compile_context>

<pallas_src>
import functools

import jax
import jax.numpy as jnp
from jax.experimental import pallas as pl
from jax.experimental.pallas import tpu as pltpu


def coattention_kernel(scalars_ref, img_ref, text_ref, tkeep_ref, ikeep_ref, out_ref):
    """One (batch b, L-tile) step.

    scalars_ref : SMEM f32[3]  -> [mean_img, mean_text, inv_denom]
    img_ref     : VMEM [R,  N, D]    (this batch's regional features, original layout)
    text_ref    : VMEM [Lt, N, D]    (this batch's text tile, original layout)
    tkeep_ref   : VMEM [Lt, 1]  f32  (1.0 = keep, 0.0 = masked text position)
    ikeep_ref   : VMEM [1,  R]  f32  (1.0 = keep, 0.0 = masked region)
    out_ref     : VMEM [N, Lt, R] f32
    """
    m_img = scalars_ref[0]
    m_text = scalars_ref[1]
    inv_denom = scalars_ref[2]

    # {0,1} mask outer-product with 1/denom folded in -> one vmul in the epilogue.
    # (masked_fill-before-tanh == multiply-by-0 before tanh, since tanh(0) == 0.)
    scaled_keep = (tkeep_ref[...] * ikeep_ref[...]) * inv_denom  # [Lt, R]

    num_cap = img_ref.shape[1]  # N: small (num_cap), static unroll
    for n in range(num_cap):
        t = text_ref[:, n, :].astype(jnp.float32) - m_text      # [Lt, D]
        v = img_ref[:, n, :].astype(jnp.float32) - m_img         # [R,  D]
        # w[l, r] = sum_d t[l, d] * v[r, d]   (f32 accumulation on the MXU)
        raw = jax.lax.dot_general(
            t, v, (((1,), (1,)), ((), ())),
            preferred_element_type=jnp.float32)                   # [Lt, R]
        out_ref[n, :, :] = jnp.tanh(raw * scaled_keep)


def co_attention(img, text, img_mask, text_mask, num_regions, l_tile=None):
    """JAX wrapper matching CoAttention.forward.

    img       : [B, R, N, D]
    text      : [B, L, N, D]
    img_mask  : [B, R] (nonzero = masked) or None
    text_mask : [B, L] (nonzero = masked) or None
    returns   : [B, L, R, N] float32
    """
    B, R, N, D = img.shape
    L = text.shape[1]
    assert R == num_regions

    # --- Global scalars (tiny bandwidth-bound reductions: let XLA do them) -------------
    imgf = img.astype(jnp.float32)
    textf = text.astype(jnp.float32)
    n_img = float(imgf.size)
    n_text = float(textf.size)
    s_i, sq_i = jnp.sum(imgf), jnp.sum(imgf * imgf)
    s_t, sq_t = jnp.sum(textf), jnp.sum(textf * textf)
    m_img = s_i / n_img
    m_text = s_t / n_text
    # torch sums the squares over the *expanded* tensors -> replication factors L, R.
    ss_img = (sq_i - s_i * s_i / n_img) * L
    ss_text = (sq_t - s_t * s_t / n_text) * R
    inv_denom = 1.0 / (jnp.sqrt(ss_img) * jnp.sqrt(ss_text))
    scalars = jnp.stack([m_img, m_text, inv_denom]).astype(jnp.float32)   # SMEM f32[3]

    # --- Compact {0,1} keep factors instead of a dense [B,L,R] mask --------------------
    if text_mask is None:
        tkeep = jnp.ones((B, L, 1), jnp.float32)
    else:
        tkeep = (text_mask == 0).astype(jnp.float32).reshape(B, L, 1)
    if img_mask is None:
        ikeep = jnp.ones((B, 1, R), jnp.float32)
    else:
        ikeep = (img_mask == 0).astype(jnp.float32).reshape(B, 1, R)

    # --- Grid / tiling ------------------------------------------------------------------
    if l_tile is None:
        l_tile = L if L <= 512 else 512          # 512 is a multiple of 8 (sublane)
    num_l_tiles = pl.cdiv(L, l_tile)
    grid = (B, num_l_tiles)

    out_knl = pl.pallas_call(
        coattention_kernel,
        out_shape=jax.ShapeDtypeStruct((B, N, L, R), jnp.float32),
        grid_spec=pltpu.PrefetchScalarGridSpec(
            num_scalar_prefetch=0,
            grid=grid,
            in_specs=[
                pl.BlockSpec(memory_space=pltpu.MemorySpace.SMEM),            # scalars
                pl.BlockSpec((None, R, N, D), lambda b, lt: (b, 0, 0, 0)),    # img
                pl.BlockSpec((None, l_tile, N, D), lambda b, lt: (b, lt, 0, 0)),  # text
                pl.BlockSpec((None, l_tile, 1), lambda b, lt: (b, lt, 0)),    # tkeep
                pl.BlockSpec((None, 1, R), lambda b, lt: (b, 0, 0)),          # ikeep
            ],
            out_specs=pl.BlockSpec((None, N, l_tile, R), lambda b, lt: (b, 0, lt, 0)),
        ),
        compiler_params=pltpu.CompilerParams(
            dimension_semantics=("parallel", "parallel"),
            vmem_limit_bytes=48 * 1024 * 1024,
        ),
    )(scalars, img, text, tkeep, ikeep)

    # Kernel emits [B, N, L, R] (R lane-dense per row); final PyTorch layout [B, L, R, N].
    # TODO(synk): the trailing transpose is one extra XLA pass over the (small) output;
    # writing [B,L,R,N] directly from the kernel would need a lane<->major in-kernel
    # transpose that is not worth it for small N.
    return jnp.transpose(out_knl, (0, 2, 3, 1))


def co_attention_ref(img, text, img_mask, text_mask, num_regions):
    """Pure-JAX reference mirroring the torch code (explicit expand semantics)."""
    B, R, N, D = img.shape
    L = text.shape[1]
    img_e = jnp.broadcast_to(img[:, None], (B, L, R, N, D)).astype(jnp.float32)
    text_e = jnp.broadcast_to(text[:, :, None], (B, L, R, N, D)).astype(jnp.float32)
    vimg = img_e - jnp.mean(img_e)
    vtext = text_e - jnp.mean(text_e)
    w = jnp.sum(vimg * vtext, axis=-1) / (
        jnp.sqrt(jnp.sum(vimg ** 2)) * jnp.sqrt(jnp.sum(vtext ** 2)))
    if text_mask is not None:
        w = jnp.where((text_mask != 0)[:, :, None, None], 0.0, w)
    if img_mask is not None:
        w = jnp.where((img_mask != 0)[:, None, :, None], 0.0, w)
    return jnp.tanh(w)


if __name__ == "__main__":
    # Small deterministic example shapes (module has no learnable parameters).
    B, R, N, D, L = 2, 16, 4, 32, 8   # batch, num_regions, num_cap, dim, text len
    key = jax.random.PRNGKey(0)
    k1, k2, k3, k4 = jax.random.split(key, 4)
    img = jax.random.normal(k1, (B, R, N, D), dtype=jnp.float32)
    text = jax.random.normal(k2, (B, L, N, D), dtype=jnp.float32)
    img_mask = (jax.random.uniform(k3, (B, R)) < 0.25).astype(jnp.float32)
    text_mask = (jax.random.uniform(k4, (B, L)) < 0.25).astype(jnp.float32)

    run = jax.jit(functools.partial(co_attention, num_regions=R))
    out = jax.block_until_ready(run(img, text, img_mask, text_mask))

    ref = co_attention_ref(img, text, img_mask, text_mask, R)
    assert out.shape == (B, L, R, N), out.shape
    assert jnp.allclose(out, ref, rtol=1e-4, atol=1e-5), \
        float(jnp.max(jnp.abs(out - ref)))

    print("KERNEL_OK")
</pallas_src>

<mosaic_0001>
module attributes {stable_mosaic.version = 11 : i64} {
  func.func @coattention_kernel(%arg0: i32, %arg1: i32, %arg2: memref<3xf32, #tpu.memory_space<smem>>, %arg3: memref<1x16x4x32xf32, #tpu.memory_space<vmem>>, %arg4: memref<1x8x4x32xf32, #tpu.memory_space<vmem>>, %arg5: memref<1x8x1xf32, #tpu.memory_space<vmem>>, %arg6: memref<1x1x16xf32, #tpu.memory_space<vmem>>, %arg7: memref<1x4x8x16xf32, #tpu.memory_space<vmem>>) attributes {dimension_semantics = [#tpu.dimension_semantics<parallel>, #tpu.dimension_semantics<parallel>], iteration_bounds = array<i64: 2, 1>, scalar_prefetch = 0 : i64, scratch_operands = 0 : i64, tpu.core_type = #tpu.core_type<tc>, window_params = [{transform_indices = @transform_0, window_bounds = array<i64: 3>}, {transform_indices = @transform_1, window_bounds = array<i64: 1, 16, 4, 32>}, {transform_indices = @transform_2, window_bounds = array<i64: 1, 8, 4, 32>}, {transform_indices = @transform_3, window_bounds = array<i64: 1, 8, 1>}, {transform_indices = @transform_4, window_bounds = array<i64: 1, 1, 16>}, {transform_indices = @transform_5, window_bounds = array<i64: 1, 4, 8, 16>}]} {
    %c0 = arith.constant 0 : index
    %0 = memref.load %arg2[%c0] : memref<3xf32, #tpu.memory_space<smem>>
    %c1 = arith.constant 1 : index
    %1 = memref.load %arg2[%c1] : memref<3xf32, #tpu.memory_space<smem>>
    %c2 = arith.constant 2 : index
    %2 = memref.load %arg2[%c2] : memref<3xf32, #tpu.memory_space<smem>>
    %c0_0 = arith.constant 0 : index
    %c0_1 = arith.constant 0 : index
    %c0_2 = arith.constant 0 : index
    %3 = vector.load %arg5[%c0_0, %c0_1, %c0_2] : memref<1x8x1xf32, #tpu.memory_space<vmem>>, vector<1x8x1xf32>
    %4 = vector.shape_cast %3 : vector<1x8x1xf32> to vector<8x1xf32>
    %c0_3 = arith.constant 0 : index
    %c0_4 = arith.constant 0 : index
    %c0_5 = arith.constant 0 : index
    %5 = vector.load %arg6[%c0_3, %c0_4, %c0_5] : memref<1x1x16xf32, #tpu.memory_space<vmem>>, vector<1x1x16xf32>
    %6 = vector.shape_cast %5 : vector<1x1x16xf32> to vector<1x16xf32>
    %7 = vector.broadcast %4 : vector<8x1xf32> to vector<8x16xf32>
    %8 = vector.broadcast %6 : vector<1x16xf32> to vector<8x16xf32>
    %9 = arith.mulf %7, %8 : vector<8x16xf32>
    %10 = vector.broadcast %2 : f32 to vector<8x16xf32>
    %11 = arith.mulf %9, %10 : vector<8x16xf32>
    %c0_6 = arith.constant 0 : index
    %c0_7 = arith.constant 0 : index
    %c0_8 = arith.constant 0 : index
    %c0_9 = arith.constant 0 : index
    %12 = vector.load %arg4[%c0_6, %c0_7, %c0_8, %c0_9] : memref<1x8x4x32xf32, #tpu.memory_space<vmem>>, vector<1x8x1x32xf32>
    %13 = vector.shape_cast %12 : vector<1x8x1x32xf32> to vector<8x32xf32>
    %14 = vector.broadcast %1 : f32 to vector<8x32xf32>
    %15 = arith.subf %13, %14 : vector<8x32xf32>
    %c0_10 = arith.constant 0 : index
    %c0_11 = arith.constant 0 : index
    %c0_12 = arith.constant 0 : index
    %c0_13 = arith.constant 0 : index
    %16 = vector.load %arg3[%c0_10, %c0_11, %c0_12, %c0_13] : memref<1x16x4x32xf32, #tpu.memory_space<vmem>>, vector<1x16x1x32xf32>
    %17 = vector.shape_cast %16 : vector<1x16x1x32xf32> to vector<16x32xf32>
    %18 = vector.broadcast %0 : f32 to vector<16x32xf32>
    %19 = arith.subf %17, %18 : vector<16x32xf32>
    %cst = arith.constant dense<0.000000e+00> : vector<8x16xf32>
    %20 = tpu.matmul %15, %19, %cst {dimension_numbers = #tpu.dot_dimension_numbers<[1], [1], [0], [0], [0, 0, 1, 0], [], []>} : vector<8x32xf32>, vector<16x32xf32>, vector<8x16xf32> -> vector<8x16xf32>
    %21 = arith.mulf %20, %11 : vector<8x16xf32>
    %22 = math.tanh %21 : vector<8x16xf32>
    %c0_14 = arith.constant 0 : index
    %c0_15 = arith.constant 0 : index
    %c0_16 = arith.constant 0 : index
    %c0_17 = arith.constant 0 : index
    %23 = vector.load %arg7[%c0_14, %c0_15, %c0_16, %c0_17] : memref<1x4x8x16xf32, #tpu.memory_space<vmem>>, vector<1x1x8x16xf32>
    %24 = vector.shape_cast %23 : vector<1x1x8x16xf32> to vector<8x16xf32>
    %25 = vector.shape_cast %22 : vector<8x16xf32> to vector<1x1x8x16xf32>
    tpu.vector_store %arg7[%c0_14, %c0_15, %c0_16, %c0_17], %25 {strides = array<i32>} : memref<1x4x8x16xf32, #tpu.memory_space<vmem>>, vector<1x1x8x16xf32>,
    %c0_18 = arith.constant 0 : index
    %c0_19 = arith.constant 0 : index
    %c1_20 = arith.constant 1 : index
    %c0_21 = arith.constant 0 : index
    %26 = vector.load %arg4[%c0_18, %c0_19, %c1_20, %c0_21] : memref<1x8x4x32xf32, #tpu.memory_space<vmem>>, vector<1x8x1x32xf32>
    %27 = vector.shape_cast %26 : vector<1x8x1x32xf32> to vector<8x32xf32>
    %28 = vector.broadcast %1 : f32 to vector<8x32xf32>
    %29 = arith.subf %27, %28 : vector<8x32xf32>
    %c0_22 = arith.constant 0 : index
    %c0_23 = arith.constant 0 : index
    %c1_24 = arith.constant 1 : index
    %c0_25 = arith.constant 0 : index
    %30 = vector.load %arg3[%c0_22, %c0_23, %c1_24, %c0_25] : memref<1x16x4x32xf32, #tpu.memory_space<vmem>>, vector<1x16x1x32xf32>
    %31 = vector.shape_cast %30 : vector<1x16x1x32xf32> to vector<16x32xf32>
    %32 = vector.broadcast %0 : f32 to vector<16x32xf32>
    %33 = arith.subf %31, %32 : vector<16x32xf32>
    %cst_26 = arith.constant dense<0.000000e+00> : vector<8x16xf32>
    %34 = tpu.matmul %29, %33, %cst_26 {dimension_numbers = #tpu.dot_dimension_numbers<[1], [1], [0], [0], [0, 0, 1, 0], [], []>} : vector<8x32xf32>, vector<16x32xf32>, vector<8x16xf32> -> vector<8x16xf32>
    %35 = arith.mulf %34, %11 : vector<8x16xf32>
    %36 = math.tanh %35 : vector<8x16xf32>
    %c0_27 = arith.constant 0 : index
    %c1_28 = arith.constant 1 : index
    %c0_29 = arith.constant 0 : index
    %c0_30 = arith.constant 0 : index
    %37 = vector.load %arg7[%c0_27, %c1_28, %c0_29, %c0_30] : memref<1x4x8x16xf32, #tpu.memory_space<vmem>>, vector<1x1x8x16xf32>
    %38 = vector.shape_cast %37 : vector<1x1x8x16xf32> to vector<8x16xf32>
    %39 = vector.shape_cast %36 : vector<8x16xf32> to vector<1x1x8x16xf32>
    tpu.vector_store %arg7[%c0_27, %c1_28, %c0_29, %c0_30], %39 {strides = array<i32>} : memref<1x4x8x16xf32, #tpu.memory_space<vmem>>, vector<1x1x8x16xf32>,
    %c0_31 = arith.constant 0 : index
    %c0_32 = arith.constant 0 : index
    %c2_33 = arith.constant 2 : index
    %c0_34 = arith.constant 0 : index
    %40 = vector.load %arg4[%c0_31, %c0_32, %c2_33, %c0_34] : memref<1x8x4x32xf32, #tpu.memory_space<vmem>>, vector<1x8x1x32xf32>
    %41 = vector.shape_cast %40 : vector<1x8x1x32xf32> to vector<8x32xf32>
    %42 = vector.broadcast %1 : f32 to vector<8x32xf32>
    %43 = arith.subf %41, %42 : vector<8x32xf32>
    %c0_35 = arith.constant 0 : index
    %c0_36 = arith.constant 0 : index
    %c2_37 = arith.constant 2 : index
    %c0_38 = arith.constant 0 : index
    %44 = vector.load %arg3[%c0_35, %c0_36, %c2_37, %c0_38] : memref<1x16x4x32xf32, #tpu.memory_space<vmem>>, vector<1x16x1x32xf32>
    %45 = vector.shape_cast %44 : vector<1x16x1x32xf32> to vector<16x32xf32>
    %46 = vector.broadcast %0 : f32 to vector<16x32xf32>
    %47 = arith.subf %45, %46 : vector<16x32xf32>
    %cst_39 = arith.constant dense<0.000000e+00> : vector<8x16xf32>
    %48 = tpu.matmul %43, %47, %cst_39 {dimension_numbers = #tpu.dot_dimension_numbers<[1], [1], [0], [0], [0, 0, 1, 0], [], []>} : vector<8x32xf32>, vector<16x32xf32>, vector<8x16xf32> -> vector<8x16xf32>
    %49 = arith.mulf %48, %11 : vector<8x16xf32>
    %50 = math.tanh %49 : vector<8x16xf32>
    %c0_40 = arith.constant 0 : index
    %c2_41 = arith.constant 2 : index
    %c0_42 = arith.constant 0 : index
    %c0_43 = arith.constant 0 : index
    %51 = vector.load %arg7[%c0_40, %c2_41, %c0_42, %c0_43] : memref<1x4x8x16xf32, #tpu.memory_space<vmem>>, vector<1x1x8x16xf32>
    %52 = vector.shape_cast %51 : vector<1x1x8x16xf32> to vector<8x16xf32>
    %53 = vector.shape_cast %50 : vector<8x16xf32> to vector<1x1x8x16xf32>
    tpu.vector_store %arg7[%c0_40, %c2_41, %c0_42, %c0_43], %53 {strides = array<i32>} : memref<1x4x8x16xf32, #tpu.memory_space<vmem>>, vector<1x1x8x16xf32>,
    %c0_44 = arith.constant 0 : index
    %c0_45 = arith.constant 0 : index
    %c3 = arith.constant 3 : index
    %c0_46 = arith.constant 0 : index
    %54 = vector.load %arg4[%c0_44, %c0_45, %c3, %c0_46] : memref<1x8x4x32xf32, #tpu.memory_space<vmem>>, vector<1x8x1x32xf32>
    %55 = vector.shape_cast %54 : vector<1x8x1x32xf32> to vector<8x32xf32>
    %56 = vector.broadcast %1 : f32 to vector<8x32xf32>
    %57 = arith.subf %55, %56 : vector<8x32xf32>
    %c0_47 = arith.constant 0 : index
    %c0_48 = arith.constant 0 : index
    %c3_49 = arith.constant 3 : index
    %c0_50 = arith.constant 0 : index
    %58 = vector.load %arg3[%c0_47, %c0_48, %c3_49, %c0_50] : memref<1x16x4x32xf32, #tpu.memory_space<vmem>>, vector<1x16x1x32xf32>
    %59 = vector.shape_cast %58 : vector<1x16x1x32xf32> to vector<16x32xf32>
    %60 = vector.broadcast %0 : f32 to vector<16x32xf32>
    %61 = arith.subf %59, %60 : vector<16x32xf32>
    %cst_51 = arith.constant dense<0.000000e+00> : vector<8x16xf32>
    %62 = tpu.matmul %57, %61, %cst_51 {dimension_numbers = #tpu.dot_dimension_numbers<[1], [1], [0], [0], [0, 0, 1, 0], [], []>} : vector<8x32xf32>, vector<16x32xf32>, vector<8x16xf32> -> vector<8x16xf32>
    %63 = arith.mulf %62, %11 : vector<8x16xf32>
    %64 = math.tanh %63 : vector<8x16xf32>
    %c0_52 = arith.constant 0 : index
    %c3_53 = arith.constant 3 : index
    %c0_54 = arith.constant 0 : index
    %c0_55 = arith.constant 0 : index
    %65 = vector.load %arg7[%c0_52, %c3_53, %c0_54, %c0_55] : memref<1x4x8x16xf32, #tpu.memory_space<vmem>>, vector<1x1x8x16xf32>
    %66 = vector.shape_cast %65 : vector<1x1x8x16xf32> to vector<8x16xf32>
    %67 = vector.shape_cast %64 : vector<8x16xf32> to vector<1x1x8x16xf32>
    tpu.vector_store %arg7[%c0_52, %c3_53, %c0_54, %c0_55], %67 {strides = array<i32>} : memref<1x4x8x16xf32, #tpu.memory_space<vmem>>, vector<1x1x8x16xf32>,
    return
  }
  func.func @transform_0(%arg0: i32, %arg1: i32) -> i32 {
    %c0_i32 = arith.constant 0 : i32
    %c0_i32_0 = arith.constant 0 : i32
    return %c0_i32 : i32
  }
  func.func @transform_1(%arg0: i32, %arg1: i32) -> (i32, i32, i32, i32) {
    %c0_i32 = arith.constant 0 : i32
    %c0_i32_0 = arith.constant 0 : i32
    %c0_i32_1 = arith.constant 0 : i32
    %c0_i32_2 = arith.constant 0 : i32
    return %arg0, %c0_i32, %c0_i32_0, %c0_i32_1 : i32, i32, i32, i32
  }
  func.func @transform_2(%arg0: i32, %arg1: i32) -> (i32, i32, i32, i32) {
    %c0_i32 = arith.constant 0 : i32
    %c0_i32_0 = arith.constant 0 : i32
    %c0_i32_1 = arith.constant 0 : i32
    return %arg0, %arg1, %c0_i32, %c0_i32_0 : i32, i32, i32, i32
  }
  func.func @transform_3(%arg0: i32, %arg1: i32) -> (i32, i32, i32) {
    %c0_i32 = arith.constant 0 : i32
    %c0_i32_0 = arith.constant 0 : i32
    return %arg0, %arg1, %c0_i32 : i32, i32, i32
  }
  func.func @transform_4(%arg0: i32, %arg1: i32) -> (i32, i32, i32) {
    %c0_i32 = arith.constant 0 : i32
    %c0_i32_0 = arith.constant 0 : i32
    %c0_i32_1 = arith.constant 0 : i32
    return %arg0, %c0_i32, %c0_i32_0 : i32, i32, i32
  }
  func.func @transform_5(%arg0: i32, %arg1: i32) -> (i32, i32, i32, i32) {
    %c0_i32 = arith.constant 0 : i32
    %c0_i32_0 = arith.constant 0 : i32
    %c0_i32_1 = arith.constant 0 : i32
    return %arg0, %c0_i32, %arg1, %c0_i32_0 : i32, i32, i32, i32
  }
}

</mosaic_0001>

<llo_original>
// kernel: co_attention.1
$region0: #{co_attention.1}
  #allocation0 [shape = 'u32[]', space=smem, size = 0x4, offset = 0x4, fixed_abs, tag = 'smem constant byte address 0x4 - core index']
  #allocation1 [shape = 'u32[144,128]{1,0:T(1,128)}', space=vmem, size = 0x12000, scoped, tag = 'internal scratch']
  %s0 = inlined_call_operand.vmem [shape: f32[3], index: 0, kind: input, shape index: {}]
  %s1 = inlined_call_operand.vmem [shape: f32[2,16,4,32], index: 1, kind: input, shape index: {}]
  %s2 = inlined_call_operand.vmem [shape: f32[2,8,4,32], index: 2, kind: input, shape index: {}]
  %s3 = inlined_call_operand.vmem [shape: f32[2,8,1], index: 3, kind: input, shape index: {}]
  %s4 = inlined_call_operand.vmem [shape: f32[2,1,16], index: 4, kind: input, shape index: {}]
  %s5 = inlined_call_operand.vmem [shape: f32[2,4,8,16], index: 5, kind: output, shape index: {}]
  %s6 = sld [smem:[#allocation0]]
  $region57: #{co_attention.1} parent=0
    _
  %s8 = ssub.s32 1, %s6
  %s9 = scalar_select 0, %s8, %s6
  $region1: #{co_attention.1} parent=0
    #allocation2 [shape = 'u8[512]{0}', space=smem, size = 0x200, scoped, tag = 'input window, operand 0, single buffered']
    #allocation3 [shape = 's32[2]{0}', space=sflag, size = 0x8, scoped, tag = 'scoped memory for co_attention.1']
    %10 = vsyncpa [#allocation3], 0
    loop: start=0, step=1, limit=4
    $region2: #{co_attention.1} parent=1 // loop_pre_header
      _
    $region3: #{co_attention.1} parent=1 // loop_header
      %s12 = sphi 0, %s16
      %p13 = scmp.ge.s32.totalorder %s12, 4
      %s19 = sphi 0, %s31
      %s20 = sphi 0, %s27
      %s21 = sphi 0, %s19
      %s22 = sphi 0, %s20
      %s23 = sphi 0, %s21
      %s24 = sphi 0, %s22
      %s32 = sphi 0, %s32
      %s34 = sphi 0, %s32
      %s35 = sphi 0, %s34
      %s49 = sphi 0, %s35
      %s55 = sphi 0, %s57
      %s58 = sphi 0, %s55
      %s59 = sphi 0, %s58
      %s75 = sphi 0, %s59
      %s83 = sphi 0, %s85
      %s86 = sphi 0, %s83
      %s87 = sphi 0, %s86
      %s103 = sphi 0, %s87
      %s111 = sphi 0, %s113
      %s114 = sphi 0, %s111
      %s115 = sphi 0, %s114
      %s131 = sphi 0, %s115
      %s137 = sphi 0, %s139
      %s140 = sphi 0, %s137
      %s141 = sphi 0, %s140
      %s157 = sphi 0, %s141
      %s165 = sphi 0, %s167
      %s168 = sphi 0, %s165
      %s169 = sphi 0, %s168
      %s185 = sphi 0, %s169
    $region4: #{co_attention.1} parent=1 // loop_header_branch
      %15 = sbr.rel (%p13) target = $region8
    $region5: #{co_attention.1} parent=1 // loop_body
      %s17 = ssub.s32 %s12, 1
      %s18 = ssub.s32 %s12, 2
      %s25 = sadd.s32 1, %s20
      %p26 = scmp.ge.s32.totalorder %s25, 1
      %s27 = scalar_select %p26, 0, %s25
      %s28 = sadd.s32 1, %s19
      %s29 = scalar_select %p26, %s28, %s19
      %p30 = scmp.ge.s32.totalorder %s29, 2
      %s31 = scalar_select %p30, 0, %s29
      %s33 = sadd.s32 %s32, 1
      %p36 = scmp.eq.s32.totalorder %s12, 1
      %p37 = scmp.ne.s32.totalorder %s32, %s34
      %p38 = scmp.eq.s32.totalorder %s12, 0
      %p39 = por %p37, %p38
      %p40 = scmp.ne.s32.totalorder %s32, %s34
      %p41 = scmp.eq.s32.totalorder %s17, 1
      %p42 = por %p40, %p41
      %p43 = scmp.ne.s32.totalorder %s34, %s35
      %p44 = scmp.eq.s32.totalorder %s17, 0
      %p45 = por %p43, %p44
      %p46 = scmp.ne.s32.totalorder %s34, %s35
      %p47 = scmp.eq.s32.totalorder %s18, 1
      %p48 = por %p46, %p47
      %p50 = scmp.ne.s32.totalorder %s35, %s49
      %p51 = scmp.eq.s32.totalorder %s18, 0
      %p52 = por %p50, %p51
      %s53 = ssub.s32 %s19, %s31
      %p54 = scmp.eq.s32.totalorder %s53, 0
      %s56 = sadd.s32 %s55, 1
      %s57 = scalar_select %p54, %s55, %s56
      %p60 = pneg %p54
      %p61 = scmp.eq.s32.totalorder %s12, 1
      %p62 = por %p60, %p61
      %p63 = scmp.ne.s32.totalorder %s55, %s58
      %p64 = scmp.eq.s32.totalorder %s12, 0
      %p65 = por %p63, %p64
      %p66 = scmp.ne.s32.totalorder %s55, %s58
      %p67 = scmp.eq.s32.totalorder %s17, 1
      %p68 = por %p66, %p67
      %p69 = scmp.ne.s32.totalorder %s58, %s59
      %p70 = scmp.eq.s32.totalorder %s17, 0
      %p71 = por %p69, %p70
      %p72 = scmp.ne.s32.totalorder %s58, %s59
      %p73 = scmp.eq.s32.totalorder %s18, 1
      %p74 = por %p72, %p73
      %p76 = scmp.ne.s32.totalorder %s59, %s75
      %p77 = scmp.eq.s32.totalorder %s18, 0
      %p78 = por %p76, %p77
      %s79 = ssub.s32 %s19, %s31
      %s80 = ssub.s32 %s20, %s27
      %s81 = sor.u32 %s79, %s80
      %p82 = scmp.eq.s32.totalorder %s81, 0
      %s84 = sadd.s32 %s83, 1
      %s85 = scalar_select %p82, %s83, %s84
      %p88 = pneg %p82
      %p89 = scmp.eq.s32.totalorder %s12, 1
      %p90 = por %p88, %p89
      %p91 = scmp.ne.s32.totalorder %s83, %s86
      %p92 = scmp.eq.s32.totalorder %s12, 0
      %p93 = por %p91, %p92
      %p94 = scmp.ne.s32.totalorder %s83, %s86
      %p95 = scmp.eq.s32.totalorder %s17, 1
      %p96 = por %p94, %p95
      %p97 = scmp.ne.s32.totalorder %s86, %s87
      %p98 = scmp.eq.s32.totalorder %s17, 0
      %p99 = por %p97, %p98
      %p100 = scmp.ne.s32.totalorder %s86, %s87
      %p101 = scmp.eq.s32.totalorder %s18, 1
      %p102 = por %p100, %p101
      %p104 = scmp.ne.s32.totalorder %s87, %s103
      %p105 = scmp.eq.s32.totalorder %s18, 0
      %p106 = por %p104, %p105
      %s107 = ssub.s32 %s19, %s31
      %s108 = ssub.s32 %s20, %s27
      %s109 = sor.u32 %s107, %s108
      %p110 = scmp.eq.s32.totalorder %s109, 0
      %s112 = sadd.s32 %s111, 1
      %s113 = scalar_select %p110, %s111, %s112
      %p116 = pneg %p110
      %p117 = scmp.eq.s32.totalorder %s12, 1
      %p118 = por %p116, %p117
      %p119 = scmp.ne.s32.totalorder %s111, %s114
      %p120 = scmp.eq.s32.totalorder %s12, 0
      %p121 = por %p119, %p120
      %p122 = scmp.ne.s32.totalorder %s111, %s114
      %p123 = scmp.eq.s32.totalorder %s17, 1
      %p124 = por %p122, %p123
      %p125 = scmp.ne.s32.totalorder %s114, %s115
      %p126 = scmp.eq.s32.totalorder %s17, 0
      %p127 = por %p125, %p126
      %p128 = scmp.ne.s32.totalorder %s114, %s115
      %p129 = scmp.eq.s32.totalorder %s18, 1
      %p130 = por %p128, %p129
      %p132 = scmp.ne.s32.totalorder %s115, %s131
      %p133 = scmp.eq.s32.totalorder %s18, 0
      %p134 = por %p132, %p133
      %s135 = ssub.s32 %s19, %s31
      %p136 = scmp.eq.s32.totalorder %s135, 0
      %s138 = sadd.s32 %s137, 1
      %s139 = scalar_select %p136, %s137, %s138
      %p142 = pneg %p136
      %p143 = scmp.eq.s32.totalorder %s12, 1
      %p144 = por %p142, %p143
      %p145 = scmp.ne.s32.totalorder %s137, %s140
      %p146 = scmp.eq.s32.totalorder %s12, 0
      %p147 = por %p145, %p146
      %p148 = scmp.ne.s32.totalorder %s137, %s140
      %p149 = scmp.eq.s32.totalorder %s17, 1
      %p150 = por %p148, %p149
      %p151 = scmp.ne.s32.totalorder %s140, %s141
      %p152 = scmp.eq.s32.totalorder %s17, 0
      %p153 = por %p151, %p152
      %p154 = scmp.ne.s32.totalorder %s140, %s141
      %p155 = scmp.eq.s32.totalorder %s18, 1
      %p156 = por %p154, %p155
      %p158 = scmp.ne.s32.totalorder %s141, %s157
      %p159 = scmp.eq.s32.totalorder %s18, 0
      %p160 = por %p158, %p159
      %s161 = ssub.s32 %s19, %s31
      %s162 = ssub.s32 %s20, %s27
      %s163 = sor.u32 %s161, %s162
      %p164 = scmp.eq.s32.totalorder %s163, 0
      %s166 = sadd.s32 %s165, 1
      %s167 = scalar_select %p164, %s165, %s166
      %p170 = pneg %p164
      %p171 = scmp.eq.s32.totalorder %s12, 1
      %p172 = por %p170, %p171
      %p173 = scmp.ne.s32.totalorder %s165, %s168
      %p174 = scmp.eq.s32.totalorder %s12, 0
      %p175 = por %p173, %p174
      %p176 = scmp.ne.s32.totalorder %s165, %s168
      %p177 = scmp.eq.s32.totalorder %s17, 1
      %p178 = por %p176, %p177
      %p179 = scmp.ne.s32.totalorder %s168, %s169
      %p180 = scmp.eq.s32.totalorder %s17, 0
      %p181 = por %p179, %p180
      %p182 = scmp.ne.s32.totalorder %s168, %s169
      %p183 = scmp.eq.s32.totalorder %s18, 1
      %p184 = por %p182, %p183
      %p186 = scmp.ne.s32.totalorder %s169, %s185
      %p187 = scmp.eq.s32.totalorder %s18, 0
      %p188 = por %p186, %p187
      %p189 = scmp.le.s32.totalorder 1, %s12
      %p190 = scmp.lt.s32.totalorder %s12, 3
      %p191 = pnand %p189, %p190
      %p192 = pneg %p191
      // Predicated region
      $region9: #{co_attention.1} parent=5 // pred_check
        _
      $region10: #{co_attention.1} parent=5 // pred_check_branch
        %194 = sbr.rel (%p191) target = $region12
      $region11: #{co_attention.1} parent=5 // pred_region
        %s195 = ssub.s32 %s12, 1
        // Predicated region
        $region13: #{co_attention.1} parent=11 // pred_check
          %p196 = pneg %p45
        $region14: #{co_attention.1} parent=11 // pred_check_branch
          %198 = sbr.rel (%p196) target = $region16
        $region15: #{co_attention.1} parent=11 // pred_region
          %s200 = ssub.s32 16, 16
          %201 = vsyncadd [#allocation3], %s200
          %s203 = sshll.u32 %s0, 4
          %s204 = int_to_ptr.vmem [resolvable:$true] %s203
          %206 = dma.vmem_to_smem %s204, 16, [#allocation2], [#allocation3]
        $region16: #{co_attention.1} parent=11 // pred_fallthru
          _
      $region12: #{co_attention.1} parent=5 // pred_fallthru
        _
      %p207 = scmp.lt.s32.totalorder %s12, 2
      // Predicated region
      $region17: #{co_attention.1} parent=5 // pred_check
        %p208 = pneg %p207
      $region18: #{co_attention.1} parent=5 // pred_check_branch
        %210 = sbr.rel (%p208) target = $region20
      $region19: #{co_attention.1} parent=5 // pred_region
        // Predicated region
        $region21: #{co_attention.1} parent=19 // pred_check
          %p211 = pneg %p65
        $region22: #{co_attention.1} parent=19 // pred_check_branch
          %213 = sbr.rel (%p211) target = $region24
        $region23: #{co_attention.1} parent=19 // pred_region
          %p214 = scmp.lt.s32.totalorder %s19, 1
          %s215 = scalar_select %p214, %s19, 1
          %s216 = smul.addr %s215, 16
          %s217 = smul.addr %s216, 4
          %s218 = scalar_lea.vmem %s1, %s217
        $region24: #{co_attention.1} parent=19 // pred_fallthru
          _
        // Predicated region
        $region25: #{co_attention.1} parent=19 // pred_check
          %p219 = pneg %p93
        $region26: #{co_attention.1} parent=19 // pred_check_branch
          %221 = sbr.rel (%p219) target = $region28
        $region27: #{co_attention.1} parent=19 // pred_region
          %s222 = smul.u32 8, %s20
          %p223 = scmp.lt.s32.totalorder %s19, 1
          %s224 = scalar_select %p223, %s19, 1
          %p225 = scmp.lt.s32.totalorder %s222, 7
          %s226 = scalar_select %p225, %s222, 7
          %s227 = smul.addr %s224, 8
          %s228 = sadd.s32 %s226, %s227
          %s229 = smul.addr %s228, 4
          %s230 = scalar_lea.vmem %s2, %s229
          %s231 = smul.u32 8, %s20
        $region28: #{co_attention.1} parent=19 // pred_fallthru
          _
        // Predicated region
        $region29: #{co_attention.1} parent=19 // pred_check
          %p232 = pneg %p121
        $region30: #{co_attention.1} parent=19 // pred_check_branch
          %234 = sbr.rel (%p232) target = $region32
        $region31: #{co_attention.1} parent=19 // pred_region
          %p235 = scmp.lt.s32.totalorder %s19, 1
          %s236 = scalar_select %p235, %s19, 1
          %p237 = scmp.lt.s32.totalorder %s20, 0
          %s238 = scalar_select %p237, %s20, 0
          %s239 = sadd.s32 %s238, %s236
          %s240 = smul.addr %s239, 8
          %s241 = scalar_lea.vmem %s3, %s240
        $region32: #{co_attention.1} parent=19 // pred_fallthru
          _
        // Predicated region
        $region33: #{co_attention.1} parent=19 // pred_check
          %p242 = pneg %p147
        $region34: #{co_attention.1} parent=19 // pred_check_branch
          %244 = sbr.rel (%p242) target = $region36
        $region35: #{co_attention.1} parent=19 // pred_region
          %p245 = scmp.lt.s32.totalorder %s19, 1
          %s246 = scalar_select %p245, %s19, 1
          %s247 = scalar_lea.vmem %s4, %s246
        $region36: #{co_attention.1} parent=19 // pred_fallthru
          _
      $region20: #{co_attention.1} parent=5 // pred_fallthru
        _
      %p248 = scmp.le.s32.totalorder 1, %s12
      %p249 = scmp.lt.s32.totalorder %s12, 3
      %p250 = pnand %p248, %p249
      %p251 = pneg %p250
      // Predicated region
      $region37: #{co_attention.1} parent=5 // pred_check
        _
      $region38: #{co_attention.1} parent=5 // pred_check_branch
        %253 = sbr.rel (%p250) target = $region40
      $region39: #{co_attention.1} parent=5 // pred_region
        %s254 = ssub.s32 %s12, 1
        // Predicated region
        $region41: #{co_attention.1} parent=39 // pred_check
          %p255 = pneg %p45
        $region42: #{co_attention.1} parent=39 // pred_check_branch
          %257 = sbr.rel (%p255) target = $region44
        $region43: #{co_attention.1} parent=39 // pred_region
          %258 = dma.done [#allocation3], 16
        $region44: #{co_attention.1} parent=39 // pred_fallthru
          _
        %259 = sfence
        %p260 = pneg %p45
        %p261 = pneg %p42
        %p262 = scmp.lt.s32.totalorder %s21, 1
        %s263 = scalar_select %p262, %s21, 1
        %s264 = smul.addr %s263, 16
        %s265 = smul.addr %s264, 4
        %s266 = scalar_lea.vmem %s1, %s265
        %p267 = pneg %p71
        %p268 = pneg %p68
        %s269 = smul.u32 8, %s22
        %p270 = scmp.lt.s32.totalorder %s21, 1
        %s271 = scalar_select %p270, %s21, 1
        %p272 = scmp.lt.s32.totalorder %s269, 7
        %s273 = scalar_select %p272, %s269, 7
        %s274 = smul.addr %s271, 8
        %s275 = sadd.s32 %s273, %s274
        %s276 = smul.addr %s275, 4
        %s277 = scalar_lea.vmem %s2, %s276
        %p278 = pneg %p99
        %p279 = pneg %p96
        %p280 = scmp.lt.s32.totalorder %s21, 1
        %s281 = scalar_select %p280, %s21, 1
        %p282 = scmp.lt.s32.totalorder %s22, 0
        %s283 = scalar_select %p282, %s22, 0
        %s284 = sadd.s32 %s283, %s281
        %s285 = smul.addr %s284, 8
        %s286 = scalar_lea.vmem %s3, %s285
        %p287 = pneg %p127
        %p288 = pneg %p124
        %p289 = scmp.lt.s32.totalorder %s21, 1
        %s290 = scalar_select %p289, %s21, 1
        %s291 = scalar_lea.vmem %s4, %s290
        %p292 = pneg %p153
        %p293 = pneg %p150
        %p294 = pneg %p181
        %p295 = pneg %p178
        %p296 = scmp.lt.s32.totalorder %s21, 1
        %s297 = scalar_select %p296, %s21, 1
        %p298 = scmp.lt.s32.totalorder %s22, 0
        %s299 = scalar_select %p298, %s22, 0
        %s300 = smul.addr %s297, 4
        %s301 = sadd.s32 %s299, %s300
        %s302 = smul.addr %s301, 8
        %s303 = scalar_lea.vmem %s5, %s302
        %p304 = scmp.lt.s32.totalorder %s21, 1
        %s305 = scalar_select %p304, %s21, 1
        %s306 = smul.addr %s305, 16
        %s307 = smul.addr %s306, 4
        %s308 = scalar_lea.vmem %s1, %s307
        %s309 = smul.u32 8, %s22
        %p310 = scmp.lt.s32.totalorder %s21, 1
        %s311 = scalar_select %p310, %s21, 1
        %p312 = scmp.lt.s32.totalorder %s309, 7
        %s313 = scalar_select %p312, %s309, 7
        %s314 = smul.addr %s311, 8
        %s315 = sadd.s32 %s313, %s314
        %s316 = smul.addr %s315, 4
        %s317 = scalar_lea.vmem %s2, %s316
        %s318 = smul.u32 8, %s22
        %p319 = scmp.lt.s32.totalorder %s21, 1
        %s320 = scalar_select %p319, %s21, 1
        %p321 = scmp.lt.s32.totalorder %s22, 0
        %s322 = scalar_select %p321, %s22, 0
        %s323 = sadd.s32 %s322, %s320
        %s324 = smul.addr %s323, 8
        %s325 = scalar_lea.vmem %s3, %s324
        %p326 = scmp.lt.s32.totalorder %s21, 1
        %s327 = scalar_select %p326, %s21, 1
        %s328 = scalar_lea.vmem %s4, %s327
        %p329 = scmp.lt.s32.totalorder %s21, 1
        %s330 = scalar_select %p329, %s21, 1
        %p331 = scmp.lt.s32.totalorder %s22, 0
        %s332 = scalar_select %p331, %s22, 0
        %s333 = smul.addr %s330, 4
        %s334 = sadd.s32 %s332, %s333
        %s335 = smul.addr %s334, 8
        %s336 = scalar_lea.vmem %s5, %s335
        %s337 = sld [smem:[#allocation2]]
        %s338 = sld [smem:[#allocation2 + $0x1]]
        %s339 = sld [smem:[#allocation2 + $0x2]]
        %v340 = vld [vmem:[%s325] sm:$0xff]
        %v341 = vld [vmem:[%s328] sm:$0x1]
        %343 = vset.pattern.permute.xlu0 0
        %344 = vperm.xlu0 %343, %v340
        %v345 = vpop.permute.xlu0 %344
        %v348 = vlaneseq
        %v349 = vshrl.u32 %v348, 7
        %v350 = vsub.s32 0, %v349
        %v351 = vrot.slane %v341, %v350
        %v353 = vmul.f32 %v345, %v351
        %v354 = vstv %s339
        %v355 = vmul.f32 %v353, %v354
        %v356 = vld [vmem:[%s317] sm:$0x1]
        %v357 = vld [vmem:[%s317 + $0x4] sm:$0x1]
        %v358 = vld [vmem:[%s317 + $0x8] sm:$0x1]
        %v359 = vld [vmem:[%s317 + $0xc] sm:$0x1]
        %v360 = vld [vmem:[%s317 + $0x10] sm:$0x1]
        %v361 = vld [vmem:[%s317 + $0x14] sm:$0x1]
        %v362 = vld [vmem:[%s317 + $0x18] sm:$0x1]
        %v363 = vld [vmem:[%s317 + $0x1c] sm:$0x1]
        %v364 = vstv %s338
        %v365 = vsub.f32 %v356, %v364
        %v366 = vsub.f32 %v357, %v364
        %v367 = vsub.f32 %v358, %v364
        %v368 = vsub.f32 %v359, %v364
        %v369 = vsub.f32 %v360, %v364
        %v370 = vsub.f32 %v361, %v364
        %v371 = vsub.f32 %v362, %v364
        %v372 = vsub.f32 %v363, %v364
        %v373 = vld [vmem:[%s308] sm:$0x1]
        %v374 = vld [vmem:[%s308 + $0x4] sm:$0x1]
        %v375 = vld [vmem:[%s308 + $0x8] sm:$0x1]
        %v376 = vld [vmem:[%s308 + $0xc] sm:$0x1]
        %v377 = vld [vmem:[%s308 + $0x10] sm:$0x1]
        %v378 = vld [vmem:[%s308 + $0x14] sm:$0x1]
        %v379 = vld [vmem:[%s308 + $0x18] sm:$0x1]
        %v380 = vld [vmem:[%s308 + $0x1c] sm:$0x1]
        %v381 = vld [vmem:[%s308 + $0x20] sm:$0x1]
        %v382 = vld [vmem:[%s308 + $0x24] sm:$0x1]
        %v383 = vld [vmem:[%s308 + $0x28] sm:$0x1]
        %v384 = vld [vmem:[%s308 + $0x2c] sm:$0x1]
        %v385 = vld [vmem:[%s308 + $0x30] sm:$0x1]
        %v386 = vld [vmem:[%s308 + $0x34] sm:$0x1]
        %v387 = vld [vmem:[%s308 + $0x38] sm:$0x1]
        %v388 = vld [vmem:[%s308 + $0x3c] sm:$0x1]
        %v389 = vstv %s337
        %v390 = vsub.f32 %v373, %v389
        %v391 = vsub.f32 %v374, %v389
        %v392 = vsub.f32 %v375, %v389
        %v393 = vsub.f32 %v376, %v389
        %v394 = vsub.f32 %v377, %v389
        %v395 = vsub.f32 %v378, %v389
        %v396 = vsub.f32 %v379, %v389
        %v397 = vsub.f32 %v380, %v389
        %v398 = vsub.f32 %v381, %v389
        %v399 = vsub.f32 %v382, %v389
        %v400 = vsub.f32 %v383, %v389
        %v401 = vsub.f32 %v384, %v389
        %v402 = vsub.f32 %v385, %v389
        %v403 = vsub.f32 %v386, %v389
        %v404 = vsub.f32 %v387, %v389
        %v405 = vsub.f32 %v388, %v389
        %v414 = vrot.slane %v366, 7
        %vm415 = vcmask 1041409
        %v416 = vsel %vm415, %v414, %v365
        %v417 = vrot.slane %v367, 6
        %vm418 = vcmask 1042434
        %v419 = vsel %vm418, %v417, %v416
        %v420 = vrot.slane %v368, 5
        %vm421 = vcmask 1043459
        %v422 = vsel %vm421, %v420, %v419
        %v423 = vrot.slane %v369, 4
        %vm424 = vcmask 1044484
        %v425 = vsel %vm424, %v423, %v422
        %v426 = vrot.slane %v370, 3
        %vm427 = vcmask 1045509
        %v428 = vsel %vm427, %v426, %v425
        %v429 = vrot.slane %v371, 2
        %vm430 = vcmask 1046534
        %v431 = vsel %vm430, %v429, %v428
        %v432 = vrot.slane %v372, 1
        %vm433 = vcmask 1047559
        %v434 = vsel %vm433, %v432, %v431
        %v451 = vrot.slane %v391, 7
        %v452 = vsel %vm415, %v451, %v390
        %v453 = vrot.slane %v392, 6
        %v454 = vsel %vm418, %v453, %v452
        %v455 = vrot.slane %v393, 5
        %v456 = vsel %vm421, %v455, %v454
        %v457 = vrot.slane %v394, 4
        %v458 = vsel %vm424, %v457, %v456
        %v459 = vrot.slane %v395, 3
        %v460 = vsel %vm427, %v459, %v458
        %v461 = vrot.slane %v396, 2
        %v462 = vsel %vm430, %v461, %v460
        %v463 = vrot.slane %v397, 1
        %v464 = vsel %vm433, %v463, %v462
        %v465 = vrot.slane %v399, 7
        %v466 = vsel %vm415, %v465, %v398
        %v467 = vrot.slane %v400, 6
        %v468 = vsel %vm418, %v467, %v466
        %v469 = vrot.slane %v401, 5
        %v470 = vsel %vm421, %v469, %v468
        %v471 = vrot.slane %v402, 4
        %v472 = vsel %vm424, %v471, %v470
        %v473 = vrot.slane %v403, 3
        %v474 = vsel %vm427, %v473, %v472
        %v475 = vrot.slane %v404, 2
        %v476 = vsel %vm430, %v475, %v474
        %v477 = vrot.slane %v405, 1
        %v478 = vsel %vm433, %v477, %v476
        %vm479 = vcmask 261120
        %v480 = vsel %vm479, %v434, 0
        %v482 = vsel %vm479, %v464, 0
        %v484 = vsel %vm479, %v478, 0
        %486 = vmatprep.subr.mxu0 0.0
        %487 = vmatpush1.xpose.msra.mxu0 %v482
        %488 = vmatprep.subr.mxu0 0.0
        %489 = vmatpush1.xpose.msra.mxu0 %v484
        %490 = vmatprep.subr.mxu0 0.0
        %491 = vmatpush1.xpose.msra.mxu0 0.0
        %492 = vmatprep.subr.mxu0 0.0
        %493 = vmatpush1.xpose.msra.mxu0 0.0
        %494 = vmatprep.subr.mxu0 0.0
        %495 = vmatpush1.xpose.msra.mxu0 0.0
        %496 = vmatprep.subr.mxu0 0.0
        %497 = vmatpush1.xpose.msra.mxu0 0.0
        %498 = vmatprep.subr.mxu0 0.0
        %499 = vmatpush1.xpose.msra.mxu0 0.0
        %500 = vmatprep.subr.mxu0 0.0
        %501 = vmatpush1.xpose.msra.mxu0 0.0
        %502 = vmatprep.subr.mxu0 0.0
        %503 = vmatpush1.xpose.msra.mxu0 0.0
        %504 = vmatprep.subr.mxu0 0.0
        %505 = vmatpush1.xpose.msra.mxu0 0.0
        %506 = vmatprep.subr.mxu0 0.0
        %507 = vmatpush1.xpose.msra.mxu0 0.0
        %508 = vmatprep.subr.mxu0 0.0
        %509 = vmatpush1.xpose.msra.mxu0 0.0
        %510 = vmatprep.subr.mxu0 0.0
        %511 = vmatpush1.xpose.msra.mxu0 0.0
        %512 = vmatprep.subr.mxu0 0.0
        %513 = vmatpush1.xpose.msra.mxu0 0.0
        %514 = vmatprep.subr.mxu0 0.0
        %515 = vmatpush1.xpose.msra.mxu0 0.0
        %516 = vmatprep.subr.mxu0 0.0
        %517 = vmatpush1.xpose.msra.mxu0 0.0
        %518 = vmatprep.subr.mxu0 0.0
        %519 = vmatpush1.xpose.msra.mxu0 0.0
        %520 = vmatprep.subr.mxu0 0.0
        %521 = vmatpush1.xpose.msra.mxu0 0.0
        %522 = vmatprep.subr.mxu0 0.0
        %523 = vmatpush1.xpose.msra.mxu0 0.0
        %524 = vmatprep.subr.mxu0 0.0
        %525 = vmatpush1.xpose.msra.mxu0 0.0
        %526 = vmatprep.subr.mxu0 0.0
        %527 = vmatpush1.xpose.msra.mxu0 0.0
        %528 = vmatprep.subr.mxu0 0.0
        %529 = vmatpush1.xpose.msra.mxu0 0.0
        %530 = vmatprep.subr.mxu0 0.0
        %531 = vmatpush1.xpose.msra.mxu0 0.0
        %532 = vmatprep.subr.mxu0 0.0
        %533 = vmatpush1.xpose.msra.mxu0 0.0
        %534 = vmatprep.subr.mxu0 0.0
        %535 = vmatpush1.xpose.msra.mxu0 0.0
        %536 = vmatprep.subr.mxu0 0.0
        %537 = vmatpush1.xpose.msra.mxu0 0.0
        %538 = vmatprep.subr.mxu0 0.0
        %539 = vmatpush1.xpose.msra.mxu0 0.0
        %540 = vmatprep.subr.mxu0 0.0
        %541 = vmatpush1.xpose.msra.mxu0 0.0
        %542 = vmatprep.subr.mxu0 0.0
        %543 = vmatpush1.xpose.msra.mxu0 0.0
        %544 = vmatprep.subr.mxu0 0.0
        %545 = vmatpush1.xpose.msra.mxu0 0.0
        %546 = vmatprep.subr.mxu0 0.0
        %547 = vmatpush1.xpose.msra.mxu0 0.0
        %548 = vmatprep.subr.mxu0 0.0
        %549 = vmatpush1.xpose.msra.mxu0 0.0
        %550 = vmatprep.mubr.f32.mxu0 0.0
        %551 = vmatmul.mubr.f32.gmra.mrb[0].mxu0 %v480
        %v552 = vpop.f32.mrb[0].mxu0
        %v553 = vadd.f32 0.0, %v552
        %v554 = vpop.f32.mrb[0].mxu0
        %555 = vdwg.mxu0
        %v556 = vmul.f32 %v553, %v355
        %v557 = vtanh.pop %v556
        %vm558 = vcmask 130048
        %559 = vst.msk [vmem:[%s336] sm:$0xff] %vm558, %v557
        %v560 = vld [vmem:[%s317 + $0x1] sm:$0x1]
        %v561 = vld [vmem:[%s317 + $0x5] sm:$0x1]
        %v562 = vld [vmem:[%s317 + $0x9] sm:$0x1]
        %v563 = vld [vmem:[%s317 + $0xd] sm:$0x1]
        %v564 = vld [vmem:[%s317 + $0x11] sm:$0x1]
        %v565 = vld [vmem:[%s317 + $0x15] sm:$0x1]
        %v566 = vld [vmem:[%s317 + $0x19] sm:$0x1]
        %v567 = vld [vmem:[%s317 + $0x1d] sm:$0x1]
        %v568 = vsub.f32 %v560, %v364
        %v569 = vsub.f32 %v561, %v364
        %v570 = vsub.f32 %v562, %v364
        %v571 = vsub.f32 %v563, %v364
        %v572 = vsub.f32 %v564, %v364
        %v573 = vsub.f32 %v565, %v364
        %v574 = vsub.f32 %v566, %v364
        %v575 = vsub.f32 %v567, %v364
        %v576 = vld [vmem:[%s308 + $0x1] sm:$0x1]
        %v577 = vld [vmem:[%s308 + $0x5] sm:$0x1]
        %v578 = vld [vmem:[%s308 + $0x9] sm:$0x1]
        %v579 = vld [vmem:[%s308 + $0xd] sm:$0x1]
        %v580 = vld [vmem:[%s308 + $0x11] sm:$0x1]
        %v581 = vld [vmem:[%s308 + $0x15] sm:$0x1]
        %v582 = vld [vmem:[%s308 + $0x19] sm:$0x1]
        %v583 = vld [vmem:[%s308 + $0x1d] sm:$0x1]
        %v584 = vld [vmem:[%s308 + $0x21] sm:$0x1]
        %v585 = vld [vmem:[%s308 + $0x25] sm:$0x1]
        %v586 = vld [vmem:[%s308 + $0x29] sm:$0x1]
        %v587 = vld [vmem:[%s308 + $0x2d] sm:$0x1]
        %v588 = vld [vmem:[%s308 + $0x31] sm:$0x1]
        %v589 = vld [vmem:[%s308 + $0x35] sm:$0x1]
        %v590 = vld [vmem:[%s308 + $0x39] sm:$0x1]
        %v591 = vld [vmem:[%s308 + $0x3d] sm:$0x1]
        %v592 = vsub.f32 %v576, %v389
        %v593 = vsub.f32 %v577, %v389
        %v594 = vsub.f32 %v578, %v389
        %v595 = vsub.f32 %v579, %v389
        %v596 = vsub.f32 %v580, %v389
        %v597 = vsub.f32 %v581, %v389
        %v598 = vsub.f32 %v582, %v389
        %v599 = vsub.f32 %v583, %v389
        %v600 = vsub.f32 %v584, %v389
        %v601 = vsub.f32 %v585, %v389
        %v602 = vsub.f32 %v586, %v389
        %v603 = vsub.f32 %v587, %v389
        %v604 = vsub.f32 %v588, %v389
        %v605 = vsub.f32 %v589, %v389
        %v606 = vsub.f32 %v590, %v389
        %v607 = vsub.f32 %v591, %v389
        %v616 = vrot.slane %v569, 7
        %v617 = vsel %vm415, %v616, %v568
        %v618 = vrot.slane %v570, 6
        %v619 = vsel %vm418, %v618, %v617
        %v620 = vrot.slane %v571, 5
        %v621 = vsel %vm421, %v620, %v619
        %v622 = vrot.slane %v572, 4
        %v623 = vsel %vm424, %v622, %v621
        %v624 = vrot.slane %v573, 3
        %v625 = vsel %vm427, %v624, %v623
        %v626 = vrot.slane %v574, 2
        %v627 = vsel %vm430, %v626, %v625
        %v628 = vrot.slane %v575, 1
        %v629 = vsel %vm433, %v628, %v627
        %v646 = vrot.slane %v593, 7
        %v647 = vsel %vm415, %v646, %v592
        %v648 = vrot.slane %v594, 6
        %v649 = vsel %vm418, %v648, %v647
        %v650 = vrot.slane %v595, 5
        %v651 = vsel %vm421, %v650, %v649
        %v652 = vrot.slane %v596, 4
        %v653 = vsel %vm424, %v652, %v651
        %v654 = vrot.slane %v597, 3
        %v655 = vsel %vm427, %v654, %v653
        %v656 = vrot.slane %v598, 2
        %v657 = vsel %vm430, %v656, %v655
        %v658 = vrot.slane %v599, 1
        %v659 = vsel %vm433, %v658, %v657
        %v660 = vrot.slane %v601, 7
        %v661 = vsel %vm415, %v660, %v600
        %v662 = vrot.slane %v602, 6
        %v663 = vsel %vm418, %v662, %v661
        %v664 = vrot.slane %v603, 5
        %v665 = vsel %vm421, %v664, %v663
        %v666 = vrot.slane %v604, 4
        %v667 = vsel %vm424, %v666, %v665
        %v668 = vrot.slane %v605, 3
        %v669 = vsel %vm427, %v668, %v667
        %v670 = vrot.slane %v606, 2
        %v671 = vsel %vm430, %v670, %v669
        %v672 = vrot.slane %v607, 1
        %v673 = vsel %vm433, %v672, %v671
        %v674 = vsel %vm479, %v629, 0
        %v676 = vsel %vm479, %v659, 0
        %v678 = vsel %vm479, %v673, 0
        %680 = vmatprep.subr.mxu0 0.0
        %681 = vmatpush1.xpose.msra.mxu0 %v676
        %682 = vmatprep.subr.mxu0 0.0
        %683 = vmatpush1.xpose.msra.mxu0 %v678
        %684 = vmatprep.subr.mxu0 0.0
        %685 = vmatpush1.xpose.msra.mxu0 0.0
        %686 = vmatprep.subr.mxu0 0.0
        %687 = vmatpush1.xpose.msra.mxu0 0.0
        %688 = vmatprep.subr.mxu0 0.0
        %689 = vmatpush1.xpose.msra.mxu0 0.0
        %690 = vmatprep.subr.mxu0 0.0
        %691 = vmatpush1.xpose.msra.mxu0 0.0
        %692 = vmatprep.subr.mxu0 0.0
        %693 = vmatpush1.xpose.msra.mxu0 0.0
        %694 = vmatprep.subr.mxu0 0.0
        %695 = vmatpush1.xpose.msra.mxu0 0.0
        %696 = vmatprep.subr.mxu0 0.0
        %697 = vmatpush1.xpose.msra.mxu0 0.0
        %698 = vmatprep.subr.mxu0 0.0
        %699 = vmatpush1.xpose.msra.mxu0 0.0
        %700 = vmatprep.subr.mxu0 0.0
        %701 = vmatpush1.xpose.msra.mxu0 0.0
        %702 = vmatprep.subr.mxu0 0.0
        %703 = vmatpush1.xpose.msra.mxu0 0.0
        %704 = vmatprep.subr.mxu0 0.0
        %705 = vmatpush1.xpose.msra.mxu0 0.0
        %706 = vmatprep.subr.mxu0 0.0
        %707 = vmatpush1.xpose.msra.mxu0 0.0
        %708 = vmatprep.subr.mxu0 0.0
        %709 = vmatpush1.xpose.msra.mxu0 0.0
        %710 = vmatprep.subr.mxu0 0.0
        %711 = vmatpush1.xpose.msra.mxu0 0.0
        %712 = vmatprep.subr.mxu0 0.0
        %713 = vmatpush1.xpose.msra.mxu0 0.0
        %714 = vmatprep.subr.mxu0 0.0
        %715 = vmatpush1.xpose.msra.mxu0 0.0
        %716 = vmatprep.subr.mxu0 0.0
        %717 = vmatpush1.xpose.msra.mxu0 0.0
        %718 = vmatprep.subr.mxu0 0.0
        %719 = vmatpush1.xpose.msra.mxu0 0.0
        %720 = vmatprep.subr.mxu0 0.0
        %721 = vmatpush1.xpose.msra.mxu0 0.0
        %722 = vmatprep.subr.mxu0 0.0
        %723 = vmatpush1.xpose.msra.mxu0 0.0
        %724 = vmatprep.subr.mxu0 0.0
        %725 = vmatpush1.xpose.msra.mxu0 0.0
        %726 = vmatprep.subr.mxu0 0.0
        %727 = vmatpush1.xpose.msra.mxu0 0.0
        %728 = vmatprep.subr.mxu0 0.0
        %729 = vmatpush1.xpose.msra.mxu0 0.0
        %730 = vmatprep.subr.mxu0 0.0
        %731 = vmatpush1.xpose.msra.mxu0 0.0
        %732 = vmatprep.subr.mxu0 0.0
        %733 = vmatpush1.xpose.msra.mxu0 0.0
        %734 = vmatprep.subr.mxu0 0.0
        %735 = vmatpush1.xpose.msra.mxu0 0.0
        %736 = vmatprep.subr.mxu0 0.0
        %737 = vmatpush1.xpose.msra.mxu0 0.0
        %738 = vmatprep.subr.mxu0 0.0
        %739 = vmatpush1.xpose.msra.mxu0 0.0
        %740 = vmatprep.subr.mxu0 0.0
        %741 = vmatpush1.xpose.msra.mxu0 0.0
        %742 = vmatprep.subr.mxu0 0.0
        %743 = vmatpush1.xpose.msra.mxu0 0.0
        %744 = vmatprep.mubr.f32.mxu0 0.0
        %745 = vmatmul.mubr.f32.gmra.mrb[0].mxu0 %v674
        %v746 = vpop.f32.mrb[0].mxu0
        %v747 = vadd.f32 0.0, %v746
        %v748 = vpop.f32.mrb[0].mxu0
        %749 = vdwg.mxu0
        %v750 = vmul.f32 %v747, %v355
        %v751 = vtanh.pop %v750
        %s752 = scalar_lea.vmem %s336, 8
        %753 = vst.msk [vmem:[%s752] sm:$0xff] %vm558, %v751
        %v754 = vld [vmem:[%s317 + $0x2] sm:$0x1]
        %v755 = vld [vmem:[%s317 + $0x6] sm:$0x1]
        %v756 = vld [vmem:[%s317 + $0xa] sm:$0x1]
        %v757 = vld [vmem:[%s317 + $0xe] sm:$0x1]
        %v758 = vld [vmem:[%s317 + $0x12] sm:$0x1]
        %v759 = vld [vmem:[%s317 + $0x16] sm:$0x1]
        %v760 = vld [vmem:[%s317 + $0x1a] sm:$0x1]
        %v761 = vld [vmem:[%s317 + $0x1e] sm:$0x1]
        %v762 = vsub.f32 %v754, %v364
        %v763 = vsub.f32 %v755, %v364
        %v764 = vsub.f32 %v756, %v364
        %v765 = vsub.f32 %v757, %v364
        %v766 = vsub.f32 %v758, %v364
        %v767 = vsub.f32 %v759, %v364
        %v768 = vsub.f32 %v760, %v364
        %v769 = vsub.f32 %v761, %v364
        %v770 = vld [vmem:[%s308 + $0x2] sm:$0x1]
        %v771 = vld [vmem:[%s308 + $0x6] sm:$0x1]
        %v772 = vld [vmem:[%s308 + $0xa] sm:$0x1]
        %v773 = vld [vmem:[%s308 + $0xe] sm:$0x1]
        %v774 = vld [vmem:[%s308 + $0x12] sm:$0x1]
        %v775 = vld [vmem:[%s308 + $0x16] sm:$0x1]
        %v776 = vld [vmem:[%s308 + $0x1a] sm:$0x1]
        %v777 = vld [vmem:[%s308 + $0x1e] sm:$0x1]
        %v778 = vld [vmem:[%s308 + $0x22] sm:$0x1]
        %v779 = vld [vmem:[%s308 + $0x26] sm:$0x1]
        %v780 = vld [vmem:[%s308 + $0x2a] sm:$0x1]
        %v781 = vld [vmem:[%s308 + $0x2e] sm:$0x1]
        %v782 = vld [vmem:[%s308 + $0x32] sm:$0x1]
        %v783 = vld [vmem:[%s308 + $0x36] sm:$0x1]
        %v784 = vld [vmem:[%s308 + $0x3a] sm:$0x1]
        %v785 = vld [vmem:[%s308 + $0x3e] sm:$0x1]
        %v786 = vsub.f32 %v770, %v389
        %v787 = vsub.f32 %v771, %v389
        %v788 = vsub.f32 %v772, %v389
        %v789 = vsub.f32 %v773, %v389
        %v790 = vsub.f32 %v774, %v389
        %v791 = vsub.f32 %v775, %v389
        %v792 = vsub.f32 %v776, %v389
        %v793 = vsub.f32 %v777, %v389
        %v794 = vsub.f32 %v778, %v389
        %v795 = vsub.f32 %v779, %v389
        %v796 = vsub.f32 %v780, %v389
        %v797 = vsub.f32 %v781, %v389
        %v798 = vsub.f32 %v782, %v389
        %v799 = vsub.f32 %v783, %v389
        %v800 = vsub.f32 %v784, %v389
        %v801 = vsub.f32 %v785, %v389
        %v810 = vrot.slane %v763, 7
        %v811 = vsel %vm415, %v810, %v762
        %v812 = vrot.slane %v764, 6
        %v813 = vsel %vm418, %v812, %v811
        %v814 = vrot.slane %v765, 5
        %v815 = vsel %vm421, %v814, %v813
        %v816 = vrot.slane %v766, 4
        %v817 = vsel %vm424, %v816, %v815
        %v818 = vrot.slane %v767, 3
        %v819 = vsel %vm427, %v818, %v817
        %v820 = vrot.slane %v768, 2
        %v821 = vsel %vm430, %v820, %v819
        %v822 = vrot.slane %v769, 1
        %v823 = vsel %vm433, %v822, %v821
        %v840 = vrot.slane %v787, 7
        %v841 = vsel %vm415, %v840, %v786
        %v842 = vrot.slane %v788, 6
        %v843 = vsel %vm418, %v842, %v841
        %v844 = vrot.slane %v789, 5
        %v845 = vsel %vm421, %v844, %v843
        %v846 = vrot.slane %v790, 4
        %v847 = vsel %vm424, %v846, %v845
        %v848 = vrot.slane %v791, 3
        %v849 = vsel %vm427, %v848, %v847
        %v850 = vrot.slane %v792, 2
        %v851 = vsel %vm430, %v850, %v849
        %v852 = vrot.slane %v793, 1
        %v853 = vsel %vm433, %v852, %v851
        %v854 = vrot.slane %v795, 7
        %v855 = vsel %vm415, %v854, %v794
        %v856 = vrot.slane %v796, 6
        %v857 = vsel %vm418, %v856, %v855
        %v858 = vrot.slane %v797, 5
        %v859 = vsel %vm421, %v858, %v857
        %v860 = vrot.slane %v798, 4
        %v861 = vsel %vm424, %v860, %v859
        %v862 = vrot.slane %v799, 3
        %v863 = vsel %vm427, %v862, %v861
        %v864 = vrot.slane %v800, 2
        %v865 = vsel %vm430, %v864, %v863
        %v866 = vrot.slane %v801, 1
        %v867 = vsel %vm433, %v866, %v865
        %v868 = vsel %vm479, %v823, 0
        %v870 = vsel %vm479, %v853, 0
        %v872 = vsel %vm479, %v867, 0
        %874 = vmatprep.subr.mxu0 0.0
        %875 = vmatpush1.xpose.msra.mxu0 %v870
        %876 = vmatprep.subr.mxu0 0.0
        %877 = vmatpush1.xpose.msra.mxu0 %v872
        %878 = vmatprep.subr.mxu0 0.0
        %879 = vmatpush1.xpose.msra.mxu0 0.0
        %880 = vmatprep.subr.mxu0 0.0
        %881 = vmatpush1.xpose.msra.mxu0 0.0
        %882 = vmatprep.subr.mxu0 0.0
        %883 = vmatpush1.xpose.msra.mxu0 0.0
        %884 = vmatprep.subr.mxu0 0.0
        %885 = vmatpush1.xpose.msra.mxu0 0.0
        %886 = vmatprep.subr.mxu0 0.0
        %887 = vmatpush1.xpose.msra.mxu0 0.0
        %888 = vmatprep.subr.mxu0 0.0
        %889 = vmatpush1.xpose.msra.mxu0 0.0
        %890 = vmatprep.subr.mxu0 0.0
        %891 = vmatpush1.xpose.msra.mxu0 0.0
        %892 = vmatprep.subr.mxu0 0.0
        %893 = vmatpush1.xpose.msra.mxu0 0.0
        %894 = vmatprep.subr.mxu0 0.0
        %895 = vmatpush1.xpose.msra.mxu0 0.0
        %896 = vmatprep.subr.mxu0 0.0
        %897 = vmatpush1.xpose.msra.mxu0 0.0
        %898 = vmatprep.subr.mxu0 0.0
        %899 = vmatpush1.xpose.msra.mxu0 0.0
        %900 = vmatprep.subr.mxu0 0.0
        %901 = vmatpush1.xpose.msra.mxu0 0.0
        %902 = vmatprep.subr.mxu0 0.0
        %903 = vmatpush1.xpose.msra.mxu0 0.0
        %904 = vmatprep.subr.mxu0 0.0
        %905 = vmatpush1.xpose.msra.mxu0 0.0
        %906 = vmatprep.subr.mxu0 0.0
        %907 = vmatpush1.xpose.msra.mxu0 0.0
        %908 = vmatprep.subr.mxu0 0.0
        %909 = vmatpush1.xpose.msra.mxu0 0.0
        %910 = vmatprep.subr.mxu0 0.0
        %911 = vmatpush1.xpose.msra.mxu0 0.0
        %912 = vmatprep.subr.mxu0 0.0
        %913 = vmatpush1.xpose.msra.mxu0 0.0
        %914 = vmatprep.subr.mxu0 0.0
        %915 = vmatpush1.xpose.msra.mxu0 0.0
        %916 = vmatprep.subr.mxu0 0.0
        %917 = vmatpush1.xpose.msra.mxu0 0.0
        %918 = vmatprep.subr.mxu0 0.0
        %919 = vmatpush1.xpose.msra.mxu0 0.0
        %920 = vmatprep.subr.mxu0 0.0
        %921 = vmatpush1.xpose.msra.mxu0 0.0
        %922 = vmatprep.subr.mxu0 0.0
        %923 = vmatpush1.xpose.msra.mxu0 0.0
        %924 = vmatprep.subr.mxu0 0.0
        %925 = vmatpush1.xpose.msra.mxu0 0.0
        %926 = vmatprep.subr.mxu0 0.0
        %927 = vmatpush1.xpose.msra.mxu0 0.0
        %928 = vmatprep.subr.mxu0 0.0
        %929 = vmatpush1.xpose.msra.mxu0 0.0
        %930 = vmatprep.subr.mxu0 0.0
        %931 = vmatpush1.xpose.msra.mxu0 0.0
        %932 = vmatprep.subr.mxu0 0.0
        %933 = vmatpush1.xpose.msra.mxu0 0.0
        %934 = vmatprep.subr.mxu0 0.0
        %935 = vmatpush1.xpose.msra.mxu0 0.0
        %936 = vmatprep.subr.mxu0 0.0
        %937 = vmatpush1.xpose.msra.mxu0 0.0
        %938 = vmatprep.mubr.f32.mxu0 0.0
        %939 = vmatmul.mubr.f32.gmra.mrb[0].mxu0 %v868
        %v940 = vpop.f32.mrb[0].mxu0
        %v941 = vadd.f32 0.0, %v940
        %v942 = vpop.f32.mrb[0].mxu0
        %943 = vdwg.mxu0
        %v944 = vmul.f32 %v941, %v355
        %v945 = vtanh.pop %v944
        %s946 = scalar_lea.vmem %s336, 16
        %947 = vst.msk [vmem:[%s946] sm:$0xff] %vm558, %v945
        %v948 = vld [vmem:[%s317 + $0x3] sm:$0x1]
        %v949 = vld [vmem:[%s317 + $0x7] sm:$0x1]
        %v950 = vld [vmem:[%s317 + $0xb] sm:$0x1]
        %v951 = vld [vmem:[%s317 + $0xf] sm:$0x1]
        %v952 = vld [vmem:[%s317 + $0x13] sm:$0x1]
        %v953 = vld [vmem:[%s317 + $0x17] sm:$0x1]
        %v954 = vld [vmem:[%s317 + $0x1b] sm:$0x1]
        %v955 = vld [vmem:[%s317 + $0x1f] sm:$0x1]
        %v956 = vsub.f32 %v948, %v364
        %v957 = vsub.f32 %v949, %v364
        %v958 = vsub.f32 %v950, %v364
        %v959 = vsub.f32 %v951, %v364
        %v960 = vsub.f32 %v952, %v364
        %v961 = vsub.f32 %v953, %v364
        %v962 = vsub.f32 %v954, %v364
        %v963 = vsub.f32 %v955, %v364
        %v964 = vld [vmem:[%s308 + $0x3] sm:$0x1]
        %v965 = vld [vmem:[%s308 + $0x7] sm:$0x1]
        %v966 = vld [vmem:[%s308 + $0xb] sm:$0x1]
        %v967 = vld [vmem:[%s308 + $0xf] sm:$0x1]
        %v968 = vld [vmem:[%s308 + $0x13] sm:$0x1]
        %v969 = vld [vmem:[%s308 + $0x17] sm:$0x1]
        %v970 = vld [vmem:[%s308 + $0x1b] sm:$0x1]
        %v971 = vld [vmem:[%s308 + $0x1f] sm:$0x1]
        %v972 = vld [vmem:[%s308 + $0x23] sm:$0x1]
        %v973 = vld [vmem:[%s308 + $0x27] sm:$0x1]
        %v974 = vld [vmem:[%s308 + $0x2b] sm:$0x1]
        %v975 = vld [vmem:[%s308 + $0x2f] sm:$0x1]
        %v976 = vld [vmem:[%s308 + $0x33] sm:$0x1]
        %v977 = vld [vmem:[%s308 + $0x37] sm:$0x1]
        %v978 = vld [vmem:[%s308 + $0x3b] sm:$0x1]
        %v979 = vld [vmem:[%s308 + $0x3f] sm:$0x1]
        %v980 = vsub.f32 %v964, %v389
        %v981 = vsub.f32 %v965, %v389
        %v982 = vsub.f32 %v966, %v389
        %v983 = vsub.f32 %v967, %v389
        %v984 = vsub.f32 %v968, %v389
        %v985 = vsub.f32 %v969, %v389
        %v986 = vsub.f32 %v970, %v389
        %v987 = vsub.f32 %v971, %v389
        %v988 = vsub.f32 %v972, %v389
        %v989 = vsub.f32 %v973, %v389
        %v990 = vsub.f32 %v974, %v389
        %v991 = vsub.f32 %v975, %v389
        %v992 = vsub.f32 %v976, %v389
        %v993 = vsub.f32 %v977, %v389
        %v994 = vsub.f32 %v978, %v389
        %v995 = vsub.f32 %v979, %v389
        %v1004 = vrot.slane %v957, 7
        %v1005 = vsel %vm415, %v1004, %v956
        %v1006 = vrot.slane %v958, 6
        %v1007 = vsel %vm418, %v1006, %v1005
        %v1008 = vrot.slane %v959, 5
        %v1009 = vsel %vm421, %v1008, %v1007
        %v1010 = vrot.slane %v960, 4
        %v1011 = vsel %vm424, %v1010, %v1009
        %v1012 = vrot.slane %v961, 3
        %v1013 = vsel %vm427, %v1012, %v1011
        %v1014 = vrot.slane %v962, 2
        %v1015 = vsel %vm430, %v1014, %v1013
        %v1016 = vrot.slane %v963, 1
        %v1017 = vsel %vm433, %v1016, %v1015
        %v1034 = vrot.slane %v981, 7
        %v1035 = vsel %vm415, %v1034, %v980
        %v1036 = vrot.slane %v982, 6
        %v1037 = vsel %vm418, %v1036, %v1035
        %v1038 = vrot.slane %v983, 5
        %v1039 = vsel %vm421, %v1038, %v1037
        %v1040 = vrot.slane %v984, 4
        %v1041 = vsel %vm424, %v1040, %v1039
        %v1042 = vrot.slane %v985, 3
        %v1043 = vsel %vm427, %v1042, %v1041
        %v1044 = vrot.slane %v986, 2
        %v1045 = vsel %vm430, %v1044, %v1043
        %v1046 = vrot.slane %v987, 1
        %v1047 = vsel %vm433, %v1046, %v1045
        %v1048 = vrot.slane %v989, 7
        %v1049 = vsel %vm415, %v1048, %v988
        %v1050 = vrot.slane %v990, 6
        %v1051 = vsel %vm418, %v1050, %v1049
        %v1052 = vrot.slane %v991, 5
        %v1053 = vsel %vm421, %v1052, %v1051
        %v1054 = vrot.slane %v992, 4
        %v1055 = vsel %vm424, %v1054, %v1053
        %v1056 = vrot.slane %v993, 3
        %v1057 = vsel %vm427, %v1056, %v1055
        %v1058 = vrot.slane %v994, 2
        %v1059 = vsel %vm430, %v1058, %v1057
        %v1060 = vrot.slane %v995, 1
        %v1061 = vsel %vm433, %v1060, %v1059
        %v1062 = vsel %vm479, %v1017, 0
        %v1064 = vsel %vm479, %v1047, 0
        %v1066 = vsel %vm479, %v1061, 0
        %1068 = vmatprep.subr.mxu0 0.0
        %1069 = vmatpush1.xpose.msra.mxu0 %v1064
        %1070 = vmatprep.subr.mxu0 0.0
        %1071 = vmatpush1.xpose.msra.mxu0 %v1066
        %1072 = vmatprep.subr.mxu0 0.0
        %1073 = vmatpush1.xpose.msra.mxu0 0.0
        %1074 = vmatprep.subr.mxu0 0.0
        %1075 = vmatpush1.xpose.msra.mxu0 0.0
        %1076 = vmatprep.subr.mxu0 0.0
        %1077 = vmatpush1.xpose.msra.mxu0 0.0
        %1078 = vmatprep.subr.mxu0 0.0
        %1079 = vmatpush1.xpose.msra.mxu0 0.0
        %1080 = vmatprep.subr.mxu0 0.0
        %1081 = vmatpush1.xpose.msra.mxu0 0.0
        %1082 = vmatprep.subr.mxu0 0.0
        %1083 = vmatpush1.xpose.msra.mxu0 0.0
        %1084 = vmatprep.subr.mxu0 0.0
        %1085 = vmatpush1.xpose.msra.mxu0 0.0
        %1086 = vmatprep.subr.mxu0 0.0
        %1087 = vmatpush1.xpose.msra.mxu0 0.0
        %1088 = vmatprep.subr.mxu0 0.0
        %1089 = vmatpush1.xpose.msra.mxu0 0.0
        %1090 = vmatprep.subr.mxu0 0.0
        %1091 = vmatpush1.xpose.msra.mxu0 0.0
        %1092 = vmatprep.subr.mxu0 0.0
        %1093 = vmatpush1.xpose.msra.mxu0 0.0
        %1094 = vmatprep.subr.mxu0 0.0
        %1095 = vmatpush1.xpose.msra.mxu0 0.0
        %1096 = vmatprep.subr.mxu0 0.0
        %1097 = vmatpush1.xpose.msra.mxu0 0.0
        %1098 = vmatprep.subr.mxu0 0.0
        %1099 = vmatpush1.xpose.msra.mxu0 0.0
        %1100 = vmatprep.subr.mxu0 0.0
        %1101 = vmatpush1.xpose.msra.mxu0 0.0
        %1102 = vmatprep.subr.mxu0 0.0
        %1103 = vmatpush1.xpose.msra.mxu0 0.0
        %1104 = vmatprep.subr.mxu0 0.0
        %1105 = vmatpush1.xpose.msra.mxu0 0.0
        %1106 = vmatprep.subr.mxu0 0.0
        %1107 = vmatpush1.xpose.msra.mxu0 0.0
        %1108 = vmatprep.subr.mxu0 0.0
        %1109 = vmatpush1.xpose.msra.mxu0 0.0
        %1110 = vmatprep.subr.mxu0 0.0
        %1111 = vmatpush1.xpose.msra.mxu0 0.0
        %1112 = vmatprep.subr.mxu0 0.0
        %1113 = vmatpush1.xpose.msra.mxu0 0.0
        %1114 = vmatprep.subr.mxu0 0.0
        %1115 = vmatpush1.xpose.msra.mxu0 0.0
        %1116 = vmatprep.subr.mxu0 0.0
        %1117 = vmatpush1.xpose.msra.mxu0 0.0
        %1118 = vmatprep.subr.mxu0 0.0
        %1119 = vmatpush1.xpose.msra.mxu0 0.0
        %1120 = vmatprep.subr.mxu0 0.0
        %1121 = vmatpush1.xpose.msra.mxu0 0.0
        %1122 = vmatprep.subr.mxu0 0.0
        %1123 = vmatpush1.xpose.msra.mxu0 0.0
        %1124 = vmatprep.subr.mxu0 0.0
        %1125 = vmatpush1.xpose.msra.mxu0 0.0
        %1126 = vmatprep.subr.mxu0 0.0
        %1127 = vmatpush1.xpose.msra.mxu0 0.0
        %1128 = vmatprep.subr.mxu0 0.0
        %1129 = vmatpush1.xpose.msra.mxu0 0.0
        %1130 = vmatprep.subr.mxu0 0.0
        %1131 = vmatpush1.xpose.msra.mxu0 0.0
        %1132 = vmatprep.mubr.f32.mxu0 0.0
        %1133 = vmatmul.mubr.f32.gmra.mrb[0].mxu0 %v1062
        %v1134 = vpop.f32.mrb[0].mxu0
        %v1135 = vadd.f32 0.0, %v1134
        %v1136 = vpop.f32.mrb[0].mxu0
        %1137 = vdwg.mxu0
        %v1138 = vmul.f32 %v1135, %v355
        %v1139 = vtanh.pop %v1138
        %s1140 = scalar_lea.vmem %s336, 24
        %1141 = vst.msk [vmem:[%s1140] sm:$0xff] %vm558, %v1139
        %p1142 = scmp.lt.s32.totalorder %s21, 1
        %s1143 = scalar_select %p1142, %s21, 1
        %p1144 = scmp.lt.s32.totalorder %s22, 0
        %s1145 = scalar_select %p1144, %s22, 0
        %s1146 = smul.addr %s1143, 4
        %s1147 = sadd.s32 %s1145, %s1146
        %s1148 = smul.addr %s1147, 8
        %s1149 = scalar_lea.vmem %s5, %s1148
        // Predicated region
        $region45: #{co_attention.1} parent=39 // pred_check
          %p1150 = pneg %p178
        $region46: #{co_attention.1} parent=39 // pred_check_branch
          %1152 = sbr.rel (%p1150) target = $region48
        $region47: #{co_attention.1} parent=39 // pred_region
          _
        $region48: #{co_attention.1} parent=39 // pred_fallthru
          _
      $region40: #{co_attention.1} parent=5 // pred_fallthru
        _
      %p1153 = scmp.le.s32.totalorder 2, %s12
      // Predicated region
      $region49: #{co_attention.1} parent=5 // pred_check
        %p1154 = pneg %p1153
      $region50: #{co_attention.1} parent=5 // pred_check_branch
        %1156 = sbr.rel (%p1154) target = $region52
      $region51: #{co_attention.1} parent=5 // pred_region
        %s1157 = ssub.s32 %s12, 2
        // Predicated region
        $region53: #{co_attention.1} parent=51 // pred_check
          %p1158 = pneg %p184
        $region54: #{co_attention.1} parent=51 // pred_check_branch
          %1160 = sbr.rel (%p1158) target = $region56
        $region55: #{co_attention.1} parent=51 // pred_region
          %p1161 = scmp.lt.s32.totalorder %s23, 1
          %s1162 = scalar_select %p1161, %s23, 1
          %p1163 = scmp.lt.s32.totalorder %s24, 0
          %s1164 = scalar_select %p1163, %s24, 0
          %s1165 = smul.addr %s1162, 4
          %s1166 = sadd.s32 %s1164, %s1165
          %s1167 = smul.addr %s1166, 8
          %s1168 = scalar_lea.vmem %s5, %s1167
        $region56: #{co_attention.1} parent=51 // pred_fallthru
          _
      $region52: #{co_attention.1} parent=5 // pred_fallthru
        _
    $region6: #{co_attention.1} parent=1 // loop_footer
      %s16 = sadd.s32 1, %s12
    $region7: #{co_attention.1} parent=1 // loop_footer_branch
      %11 = sbr.rel target = $region3
    $region8: #{co_attention.1} parent=1 // loop_exit
      _
    %1169 = vsyncpa [#allocation3], 1
    %s1170 = scalar_lea.sflag [#allocation3], 1
    %1171 = vsyncpa %s1170, 1

</llo_original>
